<compile_context>
chip_gen: v6e
topology: v6e:2x2x1
jax: 0.10.0
libtpu: 0.0.40
codegen_flags: <defaults>
</compile_context>

<pallas_src>
import jax
import jax.numpy as jnp
import numpy as np
from jax.experimental import pallas as pl
from jax.experimental.pallas import tpu as pltpu

EPS = 1e-12


# ----------------------------------------------------------------------------
# Static 0/1 boundary masks for a 3x3, stride-1, pad-1 conv.
# masks[kh*3+kw, 0, h*W+w] = 1 iff (h+kh-1, w+kw-1) is inside the image.
# ----------------------------------------------------------------------------
def _conv3x3_pad1_masks(H, W):
    hh, ww = np.meshgrid(np.arange(H), np.arange(W), indexing="ij")
    masks = np.zeros((9, 1, H * W), np.float32)
    for kh in range(3):
        for kw in range(3):
            dh, dw = kh - 1, kw - 1
            valid = ((hh + dh >= 0) & (hh + dh < H) &
                     (ww + dw >= 0) & (ww + dw < W))
            masks[kh * 3 + kw, 0, :] = valid.reshape(-1).astype(np.float32)
    return jnp.asarray(masks)


# ----------------------------------------------------------------------------
# Fully fused SpectralNorm(Conv2d) kernel (single grid step).
# ----------------------------------------------------------------------------
def _make_sn_conv3x3_kernel(N, C, H, W, Cout, power_iterations):
    HW = H * W
    K = 9 * C

    def kernel(x_ref, w2d_ref, wtap_ref, m_ref, b_ref, u_ref,
               o_ref, u_out_ref, v_out_ref, sig_ref, patches_ref):
        # x_ref:      (N, C, HW)      NCHW image, flattened spatial (lane-dense)
        # w2d_ref:    (Cout, 9*C)     torch w.view(out,-1): columns (c, kh, kw)
        # wtap_ref:   (Cout, 9*C)     tap-major columns (kh, kw, c) -> im2col order
        # m_ref:      (9, 1, HW)      per-tap zero-padding masks
        # b_ref:      (Cout, 1)       bias
        # u_ref:      (Cout, 1)       power-iteration buffer u
        # o_ref:      (N, Cout, HW)   output (already NCHW-flattened)
        # u_out_ref:  (Cout, 1), v_out_ref: (1, 9*C), sig_ref: (1, 1)
        # patches_ref:(9*C, N*HW)     VMEM im2col scratch

        # ---- power iteration (fused; rank-2 VPU/XLU ops only) --------------
        w2d = w2d_ref[...]                                   # (Cout, K)
        u_col = u_ref[...]                                   # (Cout, 1)
        v_row = None
        wv = None
        for _ in range(power_iterations):
            # v = normalize(W^T u)
            v_row = jnp.sum(w2d * u_col, axis=0, keepdims=True)          # (1, K)
            v_nrm = jnp.sqrt(jnp.sum(v_row * v_row, axis=1, keepdims=True))
            v_row = v_row / jnp.maximum(v_nrm, EPS)
            # u = normalize(W v)
            wv = jnp.sum(w2d * v_row, axis=1, keepdims=True)             # (Cout, 1)
            u_nrm = jnp.sqrt(jnp.sum(wv * wv, axis=0, keepdims=True))
            u_col = wv / jnp.maximum(u_nrm, EPS)
        sigma = jnp.sum(u_col * wv, axis=0, keepdims=True)               # (1, 1)

        u_out_ref[...] = u_col
        v_out_ref[...] = v_row
        sig_ref[...] = sigma

        # ---- fused im2col into the VMEM scratch (tap-major rows) -----------
        for n in range(N):
            x_n = x_ref[n]                                   # (C, HW)
            for kh in range(3):
                for kw in range(3):
                    tap = kh * 3 + kw
                    dh, dw = kh - 1, kw - 1
                    if dh == 0 and dw == 0:
                        shifted = x_n                        # centre tap: identity
                    else:
                        off = dh * W + dw
                        # shifted[c, p] = x[c, p + off]; wrap-around samples are
                        # zeroed by the static boundary mask (== zero padding).
                        shifted = pltpu.roll(x_n, (-off) % HW, axis=1) * m_ref[tap]
                    patches_ref[pl.ds(tap * C, C), pl.ds(n * HW, HW)] = shifted

        # ---- single MXU push, in-kernel 1/sigma scale, bias epilogue -------
        w_sn = wtap_ref[...] / sigma                         # matches torch w / sigma
        acc = jnp.dot(w_sn, patches_ref[...],
                      preferred_element_type=jnp.float32)    # (Cout, N*HW)
        bias = b_ref[...]                                    # (Cout, 1) -> lane bcast
        for n in range(N):
            o_ref[n] = acc[:, n * HW:(n + 1) * HW] + bias    # lane-dense 256-wide vst

    return kernel


def _sn_conv_fused_call(x3, w2d, w_taps, masks, bias_col, u_col,
                        N, C, H, W, Cout, power_iterations):
    HW = H * W
    K = 9 * C
    kernel = _make_sn_conv3x3_kernel(N, C, H, W, Cout, power_iterations)
    out_shape = (
        jax.ShapeDtypeStruct((N, Cout, HW), jnp.float32),    # conv output
        jax.ShapeDtypeStruct((Cout, 1), jnp.float32),        # u_new
        jax.ShapeDtypeStruct((1, K), jnp.float32),           # v_new
        jax.ShapeDtypeStruct((1, 1), jnp.float32),           # sigma
    )
    grid_spec = pltpu.PrefetchScalarGridSpec(
        num_scalar_prefetch=0,
        grid=(1,),                                           # whole problem = one step
        in_specs=[
            pl.BlockSpec((N, C, HW), lambda i: (0, 0, 0)),
            pl.BlockSpec((Cout, K), lambda i: (0, 0)),
            pl.BlockSpec((Cout, K), lambda i: (0, 0)),
            pl.BlockSpec((9, 1, HW), lambda i: (0, 0, 0)),
            pl.BlockSpec((Cout, 1), lambda i: (0, 0)),
            pl.BlockSpec((Cout, 1), lambda i: (0, 0)),
        ],
        out_specs=(
            pl.BlockSpec((N, Cout, HW), lambda i: (0, 0, 0)),
            pl.BlockSpec((Cout, 1), lambda i: (0, 0)),
            pl.BlockSpec((1, K), lambda i: (0, 0)),
            pl.BlockSpec((1, 1), lambda i: (0, 0)),
        ),
        scratch_shapes=[pltpu.VMEM((K, N * HW), jnp.float32)],  # im2col scratch ~80 KB
    )
    return pl.pallas_call(
        kernel,
        out_shape=out_shape,
        grid_spec=grid_spec,
        compiler_params=pltpu.CompilerParams(dimension_semantics=("arbitrary",)),
    )(x3, w2d, w_taps, masks, bias_col, u_col)


# ----------------------------------------------------------------------------
# SpectralNorm(Conv2d).forward
# ----------------------------------------------------------------------------
def spectral_norm_conv_forward(x, weight, bias, u, power_iterations=1):
    """x: (N, C, H, W) NCHW, weight: (Cout, C, 3, 3), bias: (Cout,), u: (Cout,).
    Returns (out NCHW, u_new, v_new, sigma)."""
    if power_iterations < 1:
        raise ValueError("power_iterations must be >= 1")
    N, C, H, W = x.shape
    Cout = weight.shape[0]
    # TODO(synk): if H*W is not a multiple of 128, pack images along the lane
    # axis (or pad spatially) to keep the output store lane-dense.

    # Tiny, unscaled weight relayouts (the 1/sigma scale happens in-kernel):
    w2d = weight.reshape(Cout, C * 9)                             # torch (c,kh,kw) cols
    w_taps = jnp.transpose(weight, (0, 2, 3, 1)).reshape(Cout, 9 * C)  # (kh,kw,c) cols
    masks = _conv3x3_pad1_masks(H, W)                             # static constants

    out3, u_col, v_row, sig = _sn_conv_fused_call(
        x.reshape(N, C, H * W), w2d, w_taps, masks,
        bias.reshape(Cout, 1), u.reshape(Cout, 1),
        N, C, H, W, Cout, power_iterations)

    out = out3.reshape(N, Cout, H, W)                             # contiguous reshape only
    return out, u_col.reshape(Cout), v_row.reshape(-1), sig[0, 0]


# ----------------------------------------------------------------------------
if __name__ == "__main__":
    key = jax.random.PRNGKey(0)
    k_x, k_w, k_b, k_u = jax.random.split(key, 4)

    N, Cin, Hh, Ww = 2, 4, 16, 16
    Cout = 8

    x = jax.random.normal(k_x, (N, Cin, Hh, Ww), dtype=jnp.float32)
    weight = jax.random.normal(k_w, (Cout, Cin, 3, 3), dtype=jnp.float32) * 0.1
    bias = jax.random.normal(k_b, (Cout,), dtype=jnp.float32) * 0.1
    u0 = jax.random.normal(k_u, (Cout,), dtype=jnp.float32)       # buffer u ~ N(0,1)

    fwd = jax.jit(spectral_norm_conv_forward, static_argnames=("power_iterations",))
    out, u_new, v_new, sigma = fwd(x, weight, bias, u0)
    jax.block_until_ready(out)

    # Reference check (plain JAX) for the same forward semantics.
    w2d_ref = weight.reshape(Cout, -1)
    v_ref = w2d_ref.T @ u0
    v_ref = v_ref / jnp.maximum(jnp.linalg.norm(v_ref), EPS)
    wv_ref = w2d_ref @ v_ref
    u_ref = wv_ref / jnp.maximum(jnp.linalg.norm(wv_ref), EPS)
    sigma_ref = u_ref @ wv_ref
    out_ref = jax.lax.conv_general_dilated(
        x, weight / sigma_ref, window_strides=(1, 1), padding=((1, 1), (1, 1)),
        dimension_numbers=("NCHW", "OIHW", "NCHW"),
        precision=jax.lax.Precision.HIGHEST,
    ) + bias.reshape(1, Cout, 1, 1)

    assert np.allclose(np.asarray(sigma), np.asarray(sigma_ref), rtol=1e-5, atol=1e-5)
    assert np.allclose(np.asarray(u_new), np.asarray(u_ref), rtol=1e-5, atol=1e-5)
    assert np.allclose(np.asarray(v_new), np.asarray(v_ref), rtol=1e-5, atol=1e-5)
    assert np.allclose(np.asarray(out), np.asarray(out_ref), rtol=1e-4, atol=1e-4)
    print("KERNEL_OK")
</pallas_src>

<mosaic_0001>
module attributes {stable_mosaic.version = 11 : i64} {
  func.func @kernel(%arg0: i32, %arg1: memref<2x4x256xf32, #tpu.memory_space<vmem>>, %arg2: memref<8x36xf32, #tpu.memory_space<vmem>>, %arg3: memref<8x36xf32, #tpu.memory_space<vmem>>, %arg4: memref<9x1x256xf32, #tpu.memory_space<vmem>>, %arg5: memref<8x1xf32, #tpu.memory_space<vmem>>, %arg6: memref<8x1xf32, #tpu.memory_space<vmem>>, %arg7: memref<2x8x256xf32, #tpu.memory_space<vmem>>, %arg8: memref<8x1xf32, #tpu.memory_space<vmem>>, %arg9: memref<1x36xf32, #tpu.memory_space<vmem>>, %arg10: memref<1x1xf32, #tpu.memory_space<vmem>>, %arg11: memref<36x512xf32, #tpu.memory_space<vmem>>) attributes {dimension_semantics = [#tpu.dimension_semantics<arbitrary>], iteration_bounds = array<i64: 1>, scalar_prefetch = 0 : i64, scratch_operands = 1 : i64, tpu.core_type = #tpu.core_type<tc>, window_params = [{pipeline_mode = #tpu.pipeline_mode<synchronous>, transform_indices = @transform_0, window_bounds = array<i64: 2, 4, 256>}, {pipeline_mode = #tpu.pipeline_mode<synchronous>, transform_indices = @transform_1, window_bounds = array<i64: 8, 36>}, {pipeline_mode = #tpu.pipeline_mode<synchronous>, transform_indices = @transform_2, window_bounds = array<i64: 8, 36>}, {pipeline_mode = #tpu.pipeline_mode<synchronous>, transform_indices = @transform_3, window_bounds = array<i64: 9, 1, 256>}, {pipeline_mode = #tpu.pipeline_mode<synchronous>, transform_indices = @transform_4, window_bounds = array<i64: 8, 1>}, {pipeline_mode = #tpu.pipeline_mode<synchronous>, transform_indices = @transform_5, window_bounds = array<i64: 8, 1>}, {pipeline_mode = #tpu.pipeline_mode<synchronous>, transform_indices = @transform_6, window_bounds = array<i64: 2, 8, 256>}, {pipeline_mode = #tpu.pipeline_mode<synchronous>, transform_indices = @transform_7, window_bounds = array<i64: 8, 1>}, {pipeline_mode = #tpu.pipeline_mode<synchronous>, transform_indices = @transform_8, window_bounds = array<i64: 1, 36>}, {pipeline_mode = #tpu.pipeline_mode<synchronous>, transform_indices = @transform_9, window_bounds = array<i64: 1, 1>}]} {
    %c0 = arith.constant 0 : index
    %c0_0 = arith.constant 0 : index
    %0 = vector.load %arg2[%c0, %c0_0] : memref<8x36xf32, #tpu.memory_space<vmem>>, vector<8x36xf32>
    %c0_1 = arith.constant 0 : index
    %c0_2 = arith.constant 0 : index
    %1 = vector.load %arg6[%c0_1, %c0_2] : memref<8x1xf32, #tpu.memory_space<vmem>>, vector<8x1xf32>
    %2 = vector.broadcast %1 : vector<8x1xf32> to vector<8x36xf32>
    %3 = arith.mulf %0, %2 : vector<8x36xf32>
    %cst = arith.constant dense<0.000000e+00> : vector<36xf32>
    %4 = vector.multi_reduction <add>, %3, %cst [0] : vector<8x36xf32> to vector<36xf32>
    %5 = vector.shape_cast %4 : vector<36xf32> to vector<1x36xf32>
    %6 = arith.mulf %5, %5 : vector<1x36xf32>
    %cst_3 = arith.constant dense<0.000000e+00> : vector<1xf32>
    %7 = vector.multi_reduction <add>, %6, %cst_3 [1] : vector<1x36xf32> to vector<1xf32>
    %8 = vector.shape_cast %7 : vector<1xf32> to vector<1x1xf32>
    %9 = math.sqrt %8 : vector<1x1xf32>
    %cst_4 = arith.constant 9.99999996E-13 : f32
    %10 = vector.broadcast %cst_4 : f32 to vector<1x1xf32>
    %11 = arith.maximumf %9, %10 : vector<1x1xf32>
    %12 = vector.broadcast %11 : vector<1x1xf32> to vector<1x36xf32>
    %13 = arith.divf %5, %12 : vector<1x36xf32>
    %14 = vector.broadcast %13 : vector<1x36xf32> to vector<8x36xf32>
    %15 = arith.mulf %0, %14 : vector<8x36xf32>
    %cst_5 = arith.constant dense<0.000000e+00> : vector<8xf32>
    %16 = vector.multi_reduction <add>, %15, %cst_5 [1] : vector<8x36xf32> to vector<8xf32>
    %17 = vector.shape_cast %16 : vector<8xf32> to vector<8x1xf32>
    %18 = arith.mulf %17, %17 : vector<8x1xf32>
    %cst_6 = arith.constant dense<0.000000e+00> : vector<1xf32>
    %19 = vector.multi_reduction <add>, %18, %cst_6 [0] : vector<8x1xf32> to vector<1xf32>
    %20 = vector.shape_cast %19 : vector<1xf32> to vector<1x1xf32>
    %21 = math.sqrt %20 : vector<1x1xf32>
    %cst_7 = arith.constant 9.99999996E-13 : f32
    %22 = vector.broadcast %cst_7 : f32 to vector<1x1xf32>
    %23 = arith.maximumf %21, %22 : vector<1x1xf32>
    %24 = vector.broadcast %23 : vector<1x1xf32> to vector<8x1xf32>
    %25 = arith.divf %17, %24 : vector<8x1xf32>
    %26 = arith.mulf %25, %17 : vector<8x1xf32>
    %cst_8 = arith.constant dense<0.000000e+00> : vector<1xf32>
    %27 = vector.multi_reduction <add>, %26, %cst_8 [0] : vector<8x1xf32> to vector<1xf32>
    %28 = vector.shape_cast %27 : vector<1xf32> to vector<1x1xf32>
    %c0_9 = arith.constant 0 : index
    %c0_10 = arith.constant 0 : index
    %29 = vector.load %arg8[%c0_9, %c0_10] : memref<8x1xf32, #tpu.memory_space<vmem>>, vector<8x1xf32>
    tpu.vector_store %arg8[%c0_9, %c0_10], %25 {strides = array<i32>} : memref<8x1xf32, #tpu.memory_space<vmem>>, vector<8x1xf32>,
    %c0_11 = arith.constant 0 : index
    %c0_12 = arith.constant 0 : index
    %30 = vector.load %arg9[%c0_11, %c0_12] : memref<1x36xf32, #tpu.memory_space<vmem>>, vector<1x36xf32>
    tpu.vector_store %arg9[%c0_11, %c0_12], %13 {strides = array<i32>} : memref<1x36xf32, #tpu.memory_space<vmem>>, vector<1x36xf32>,
    %c0_13 = arith.constant 0 : index
    %c0_14 = arith.constant 0 : index
    %31 = vector.load %arg10[%c0_13, %c0_14] : memref<1x1xf32, #tpu.memory_space<vmem>>, vector<1x1xf32>
    tpu.vector_store %arg10[%c0_13, %c0_14], %28 {strides = array<i32>} : memref<1x1xf32, #tpu.memory_space<vmem>>, vector<1x1xf32>,
    %c0_15 = arith.constant 0 : index
    %c0_16 = arith.constant 0 : index
    %c0_17 = arith.constant 0 : index
    %32 = vector.load %arg1[%c0_15, %c0_16, %c0_17] : memref<2x4x256xf32, #tpu.memory_space<vmem>>, vector<1x4x256xf32>
    %33 = vector.shape_cast %32 : vector<1x4x256xf32> to vector<4x256xf32>
    %c17_i32 = arith.constant 17 : i32
    %34 = tpu.dynamic_rotate %33 by %c17_i32 dim 1 : vector<4x256xf32>, i32 -> vector<4x256xf32>
    %c0_18 = arith.constant 0 : index
    %c0_19 = arith.constant 0 : index
    %c0_20 = arith.constant 0 : index
    %35 = vector.load %arg4[%c0_18, %c0_19, %c0_20] : memref<9x1x256xf32, #tpu.memory_space<vmem>>, vector<1x1x256xf32>
    %36 = vector.shape_cast %35 : vector<1x1x256xf32> to vector<1x256xf32>
    %37 = vector.broadcast %36 : vector<1x256xf32> to vector<4x256xf32>
    %38 = arith.mulf %34, %37 : vector<4x256xf32>
    %c0_21 = arith.constant 0 : index
    %c0_22 = arith.constant 0 : index
    %39 = vector.load %arg11[%c0_21, %c0_22] : memref<36x512xf32, #tpu.memory_space<vmem>>, vector<4x256xf32>
    tpu.vector_store %arg11[%c0_21, %c0_22], %38 {strides = array<i32>} : memref<36x512xf32, #tpu.memory_space<vmem>>, vector<4x256xf32>,
    %c16_i32 = arith.constant 16 : i32
    %40 = tpu.dynamic_rotate %33 by %c16_i32 dim 1 : vector<4x256xf32>, i32 -> vector<4x256xf32>
    %c1 = arith.constant 1 : index
    %c0_23 = arith.constant 0 : index
    %c0_24 = arith.constant 0 : index
    %41 = vector.load %arg4[%c1, %c0_23, %c0_24] : memref<9x1x256xf32, #tpu.memory_space<vmem>>, vector<1x1x256xf32>
    %42 = vector.shape_cast %41 : vector<1x1x256xf32> to vector<1x256xf32>
    %43 = vector.broadcast %42 : vector<1x256xf32> to vector<4x256xf32>
    %44 = arith.mulf %40, %43 : vector<4x256xf32>
    %c4 = arith.constant 4 : index
    %c0_25 = arith.constant 0 : index
    %45 = vector.load %arg11[%c4, %c0_25] : memref<36x512xf32, #tpu.memory_space<vmem>>, vector<4x256xf32>
    tpu.vector_store %arg11[%c4, %c0_25], %44 {strides = array<i32>} : memref<36x512xf32, #tpu.memory_space<vmem>>, vector<4x256xf32>,
    %c15_i32 = arith.constant 15 : i32
    %46 = tpu.dynamic_rotate %33 by %c15_i32 dim 1 : vector<4x256xf32>, i32 -> vector<4x256xf32>
    %c2 = arith.constant 2 : index
    %c0_26 = arith.constant 0 : index
    %c0_27 = arith.constant 0 : index
    %47 = vector.load %arg4[%c2, %c0_26, %c0_27] : memref<9x1x256xf32, #tpu.memory_space<vmem>>, vector<1x1x256xf32>
    %48 = vector.shape_cast %47 : vector<1x1x256xf32> to vector<1x256xf32>
    %49 = vector.broadcast %48 : vector<1x256xf32> to vector<4x256xf32>
    %50 = arith.mulf %46, %49 : vector<4x256xf32>
    %c8 = arith.constant 8 : index
    %c0_28 = arith.constant 0 : index
    %51 = vector.load %arg11[%c8, %c0_28] : memref<36x512xf32, #tpu.memory_space<vmem>>, vector<4x256xf32>
    tpu.vector_store %arg11[%c8, %c0_28], %50 {strides = array<i32>} : memref<36x512xf32, #tpu.memory_space<vmem>>, vector<4x256xf32>,
    %c1_i32 = arith.constant 1 : i32
    %52 = tpu.dynamic_rotate %33 by %c1_i32 dim 1 : vector<4x256xf32>, i32 -> vector<4x256xf32>
    %c3 = arith.constant 3 : index
    %c0_29 = arith.constant 0 : index
    %c0_30 = arith.constant 0 : index
    %53 = vector.load %arg4[%c3, %c0_29, %c0_30] : memref<9x1x256xf32, #tpu.memory_space<vmem>>, vector<1x1x256xf32>
    %54 = vector.shape_cast %53 : vector<1x1x256xf32> to vector<1x256xf32>
    %55 = vector.broadcast %54 : vector<1x256xf32> to vector<4x256xf32>
    %56 = arith.mulf %52, %55 : vector<4x256xf32>
    %c12 = arith.constant 12 : index
    %c0_31 = arith.constant 0 : index
    %57 = vector.load %arg11[%c12, %c0_31] : memref<36x512xf32, #tpu.memory_space<vmem>>, vector<4x256xf32>
    tpu.vector_store %arg11[%c12, %c0_31], %56 {strides = array<i32>} : memref<36x512xf32, #tpu.memory_space<vmem>>, vector<4x256xf32>,
    %c16 = arith.constant 16 : index
    %c0_32 = arith.constant 0 : index
    %58 = vector.load %arg11[%c16, %c0_32] : memref<36x512xf32, #tpu.memory_space<vmem>>, vector<4x256xf32>
    tpu.vector_store %arg11[%c16, %c0_32], %33 {strides = array<i32>} : memref<36x512xf32, #tpu.memory_space<vmem>>, vector<4x256xf32>,
    %c255_i32 = arith.constant 255 : i32
    %59 = tpu.dynamic_rotate %33 by %c255_i32 dim 1 : vector<4x256xf32>, i32 -> vector<4x256xf32>
    %c5 = arith.constant 5 : index
    %c0_33 = arith.constant 0 : index
    %c0_34 = arith.constant 0 : index
    %60 = vector.load %arg4[%c5, %c0_33, %c0_34] : memref<9x1x256xf32, #tpu.memory_space<vmem>>, vector<1x1x256xf32>
    %61 = vector.shape_cast %60 : vector<1x1x256xf32> to vector<1x256xf32>
    %62 = vector.broadcast %61 : vector<1x256xf32> to vector<4x256xf32>
    %63 = arith.mulf %59, %62 : vector<4x256xf32>
    %c20 = arith.constant 20 : index
    %c0_35 = arith.constant 0 : index
    %64 = vector.load %arg11[%c20, %c0_35] : memref<36x512xf32, #tpu.memory_space<vmem>>, vector<4x256xf32>
    tpu.vector_store %arg11[%c20, %c0_35], %63 {strides = array<i32>} : memref<36x512xf32, #tpu.memory_space<vmem>>, vector<4x256xf32>,
    %c241_i32 = arith.constant 241 : i32
    %65 = tpu.dynamic_rotate %33 by %c241_i32 dim 1 : vector<4x256xf32>, i32 -> vector<4x256xf32>
    %c6 = arith.constant 6 : index
    %c0_36 = arith.constant 0 : index
    %c0_37 = arith.constant 0 : index
    %66 = vector.load %arg4[%c6, %c0_36, %c0_37] : memref<9x1x256xf32, #tpu.memory_space<vmem>>, vector<1x1x256xf32>
    %67 = vector.shape_cast %66 : vector<1x1x256xf32> to vector<1x256xf32>
    %68 = vector.broadcast %67 : vector<1x256xf32> to vector<4x256xf32>
    %69 = arith.mulf %65, %68 : vector<4x256xf32>
    %c24 = arith.constant 24 : index
    %c0_38 = arith.constant 0 : index
    %70 = vector.load %arg11[%c24, %c0_38] : memref<36x512xf32, #tpu.memory_space<vmem>>, vector<4x256xf32>
    tpu.vector_store %arg11[%c24, %c0_38], %69 {strides = array<i32>} : memref<36x512xf32, #tpu.memory_space<vmem>>, vector<4x256xf32>,
    %c240_i32 = arith.constant 240 : i32
    %71 = tpu.dynamic_rotate %33 by %c240_i32 dim 1 : vector<4x256xf32>, i32 -> vector<4x256xf32>
    %c7 = arith.constant 7 : index
    %c0_39 = arith.constant 0 : index
    %c0_40 = arith.constant 0 : index
    %72 = vector.load %arg4[%c7, %c0_39, %c0_40] : memref<9x1x256xf32, #tpu.memory_space<vmem>>, vector<1x1x256xf32>
    %73 = vector.shape_cast %72 : vector<1x1x256xf32> to vector<1x256xf32>
    %74 = vector.broadcast %73 : vector<1x256xf32> to vector<4x256xf32>
    %75 = arith.mulf %71, %74 : vector<4x256xf32>
    %c28 = arith.constant 28 : index
    %c0_41 = arith.constant 0 : index
    %76 = vector.load %arg11[%c28, %c0_41] : memref<36x512xf32, #tpu.memory_space<vmem>>, vector<4x256xf32>
    tpu.vector_store %arg11[%c28, %c0_41], %75 {strides = array<i32>} : memref<36x512xf32, #tpu.memory_space<vmem>>, vector<4x256xf32>,
    %c239_i32 = arith.constant 239 : i32
    %77 = tpu.dynamic_rotate %33 by %c239_i32 dim 1 : vector<4x256xf32>, i32 -> vector<4x256xf32>
    %c8_42 = arith.constant 8 : index
    %c0_43 = arith.constant 0 : index
    %c0_44 = arith.constant 0 : index
    %78 = vector.load %arg4[%c8_42, %c0_43, %c0_44] : memref<9x1x256xf32, #tpu.memory_space<vmem>>, vector<1x1x256xf32>
    %79 = vector.shape_cast %78 : vector<1x1x256xf32> to vector<1x256xf32>
    %80 = vector.broadcast %79 : vector<1x256xf32> to vector<4x256xf32>
    %81 = arith.mulf %77, %80 : vector<4x256xf32>
    %c32 = arith.constant 32 : index
    %c0_45 = arith.constant 0 : index
    %82 = vector.load %arg11[%c32, %c0_45] : memref<36x512xf32, #tpu.memory_space<vmem>>, vector<4x256xf32>
    tpu.vector_store %arg11[%c32, %c0_45], %81 {strides = array<i32>} : memref<36x512xf32, #tpu.memory_space<vmem>>, vector<4x256xf32>,
    %c1_46 = arith.constant 1 : index
    %c0_47 = arith.constant 0 : index
    %c0_48 = arith.constant 0 : index
    %83 = vector.load %arg1[%c1_46, %c0_47, %c0_48] : memref<2x4x256xf32, #tpu.memory_space<vmem>>, vector<1x4x256xf32>
    %84 = vector.shape_cast %83 : vector<1x4x256xf32> to vector<4x256xf32>
    %c17_i32_49 = arith.constant 17 : i32
    %85 = tpu.dynamic_rotate %84 by %c17_i32_49 dim 1 : vector<4x256xf32>, i32 -> vector<4x256xf32>
    %c0_50 = arith.constant 0 : index
    %c0_51 = arith.constant 0 : index
    %c0_52 = arith.constant 0 : index
    %86 = vector.load %arg4[%c0_50, %c0_51, %c0_52] : memref<9x1x256xf32, #tpu.memory_space<vmem>>, vector<1x1x256xf32>
    %87 = vector.shape_cast %86 : vector<1x1x256xf32> to vector<1x256xf32>
    %88 = vector.broadcast %87 : vector<1x256xf32> to vector<4x256xf32>
    %89 = arith.mulf %85, %88 : vector<4x256xf32>
    %c0_53 = arith.constant 0 : index
    %c256 = arith.constant 256 : index
    %90 = vector.load %arg11[%c0_53, %c256] : memref<36x512xf32, #tpu.memory_space<vmem>>, vector<4x256xf32>
    tpu.vector_store %arg11[%c0_53, %c256], %89 {strides = array<i32>} : memref<36x512xf32, #tpu.memory_space<vmem>>, vector<4x256xf32>,
    %c16_i32_54 = arith.constant 16 : i32
    %91 = tpu.dynamic_rotate %84 by %c16_i32_54 dim 1 : vector<4x256xf32>, i32 -> vector<4x256xf32>
    %c1_55 = arith.constant 1 : index
    %c0_56 = arith.constant 0 : index
    %c0_57 = arith.constant 0 : index
    %92 = vector.load %arg4[%c1_55, %c0_56, %c0_57] : memref<9x1x256xf32, #tpu.memory_space<vmem>>, vector<1x1x256xf32>
    %93 = vector.shape_cast %92 : vector<1x1x256xf32> to vector<1x256xf32>
    %94 = vector.broadcast %93 : vector<1x256xf32> to vector<4x256xf32>
    %95 = arith.mulf %91, %94 : vector<4x256xf32>
    %c4_58 = arith.constant 4 : index
    %c256_59 = arith.constant 256 : index
    %96 = vector.load %arg11[%c4_58, %c256_59] : memref<36x512xf32, #tpu.memory_space<vmem>>, vector<4x256xf32>
    tpu.vector_store %arg11[%c4_58, %c256_59], %95 {strides = array<i32>} : memref<36x512xf32, #tpu.memory_space<vmem>>, vector<4x256xf32>,
    %c15_i32_60 = arith.constant 15 : i32
    %97 = tpu.dynamic_rotate %84 by %c15_i32_60 dim 1 : vector<4x256xf32>, i32 -> vector<4x256xf32>
    %c2_61 = arith.constant 2 : index
    %c0_62 = arith.constant 0 : index
    %c0_63 = arith.constant 0 : index
    %98 = vector.load %arg4[%c2_61, %c0_62, %c0_63] : memref<9x1x256xf32, #tpu.memory_space<vmem>>, vector<1x1x256xf32>
    %99 = vector.shape_cast %98 : vector<1x1x256xf32> to vector<1x256xf32>
    %100 = vector.broadcast %99 : vector<1x256xf32> to vector<4x256xf32>
    %101 = arith.mulf %97, %100 : vector<4x256xf32>
    %c8_64 = arith.constant 8 : index
    %c256_65 = arith.constant 256 : index
    %102 = vector.load %arg11[%c8_64, %c256_65] : memref<36x512xf32, #tpu.memory_space<vmem>>, vector<4x256xf32>
    tpu.vector_store %arg11[%c8_64, %c256_65], %101 {strides = array<i32>} : memref<36x512xf32, #tpu.memory_space<vmem>>, vector<4x256xf32>,
    %c1_i32_66 = arith.constant 1 : i32
    %103 = tpu.dynamic_rotate %84 by %c1_i32_66 dim 1 : vector<4x256xf32>, i32 -> vector<4x256xf32>
    %c3_67 = arith.constant 3 : index
    %c0_68 = arith.constant 0 : index
    %c0_69 = arith.constant 0 : index
    %104 = vector.load %arg4[%c3_67, %c0_68, %c0_69] : memref<9x1x256xf32, #tpu.memory_space<vmem>>, vector<1x1x256xf32>
    %105 = vector.shape_cast %104 : vector<1x1x256xf32> to vector<1x256xf32>
    %106 = vector.broadcast %105 : vector<1x256xf32> to vector<4x256xf32>
    %107 = arith.mulf %103, %106 : vector<4x256xf32>
    %c12_70 = arith.constant 12 : index
    %c256_71 = arith.constant 256 : index
    %108 = vector.load %arg11[%c12_70, %c256_71] : memref<36x512xf32, #tpu.memory_space<vmem>>, vector<4x256xf32>
    tpu.vector_store %arg11[%c12_70, %c256_71], %107 {strides = array<i32>} : memref<36x512xf32, #tpu.memory_space<vmem>>, vector<4x256xf32>,
    %c16_72 = arith.constant 16 : index
    %c256_73 = arith.constant 256 : index
    %109 = vector.load %arg11[%c16_72, %c256_73] : memref<36x512xf32, #tpu.memory_space<vmem>>, vector<4x256xf32>
    tpu.vector_store %arg11[%c16_72, %c256_73], %84 {strides = array<i32>} : memref<36x512xf32, #tpu.memory_space<vmem>>, vector<4x256xf32>,
    %c255_i32_74 = arith.constant 255 : i32
    %110 = tpu.dynamic_rotate %84 by %c255_i32_74 dim 1 : vector<4x256xf32>, i32 -> vector<4x256xf32>
    %c5_75 = arith.constant 5 : index
    %c0_76 = arith.constant 0 : index
    %c0_77 = arith.constant 0 : index
    %111 = vector.load %arg4[%c5_75, %c0_76, %c0_77] : memref<9x1x256xf32, #tpu.memory_space<vmem>>, vector<1x1x256xf32>
    %112 = vector.shape_cast %111 : vector<1x1x256xf32> to vector<1x256xf32>
    %113 = vector.broadcast %112 : vector<1x256xf32> to vector<4x256xf32>
    %114 = arith.mulf %110, %113 : vector<4x256xf32>
    %c20_78 = arith.constant 20 : index
    %c256_79 = arith.constant 256 : index
    %115 = vector.load %arg11[%c20_78, %c256_79] : memref<36x512xf32, #tpu.memory_space<vmem>>, vector<4x256xf32>
    tpu.vector_store %arg11[%c20_78, %c256_79], %114 {strides = array<i32>} : memref<36x512xf32, #tpu.memory_space<vmem>>, vector<4x256xf32>,
    %c241_i32_80 = arith.constant 241 : i32
    %116 = tpu.dynamic_rotate %84 by %c241_i32_80 dim 1 : vector<4x256xf32>, i32 -> vector<4x256xf32>
    %c6_81 = arith.constant 6 : index
    %c0_82 = arith.constant 0 : index
    %c0_83 = arith.constant 0 : index
    %117 = vector.load %arg4[%c6_81, %c0_82, %c0_83] : memref<9x1x256xf32, #tpu.memory_space<vmem>>, vector<1x1x256xf32>
    %118 = vector.shape_cast %117 : vector<1x1x256xf32> to vector<1x256xf32>
    %119 = vector.broadcast %118 : vector<1x256xf32> to vector<4x256xf32>
    %120 = arith.mulf %116, %119 : vector<4x256xf32>
    %c24_84 = arith.constant 24 : index
    %c256_85 = arith.constant 256 : index
    %121 = vector.load %arg11[%c24_84, %c256_85] : memref<36x512xf32, #tpu.memory_space<vmem>>, vector<4x256xf32>
    tpu.vector_store %arg11[%c24_84, %c256_85], %120 {strides = array<i32>} : memref<36x512xf32, #tpu.memory_space<vmem>>, vector<4x256xf32>,
    %c240_i32_86 = arith.constant 240 : i32
    %122 = tpu.dynamic_rotate %84 by %c240_i32_86 dim 1 : vector<4x256xf32>, i32 -> vector<4x256xf32>
    %c7_87 = arith.constant 7 : index
    %c0_88 = arith.constant 0 : index
    %c0_89 = arith.constant 0 : index
    %123 = vector.load %arg4[%c7_87, %c0_88, %c0_89] : memref<9x1x256xf32, #tpu.memory_space<vmem>>, vector<1x1x256xf32>
    %124 = vector.shape_cast %123 : vector<1x1x256xf32> to vector<1x256xf32>
    %125 = vector.broadcast %124 : vector<1x256xf32> to vector<4x256xf32>
    %126 = arith.mulf %122, %125 : vector<4x256xf32>
    %c28_90 = arith.constant 28 : index
    %c256_91 = arith.constant 256 : index
    %127 = vector.load %arg11[%c28_90, %c256_91] : memref<36x512xf32, #tpu.memory_space<vmem>>, vector<4x256xf32>
    tpu.vector_store %arg11[%c28_90, %c256_91], %126 {strides = array<i32>} : memref<36x512xf32, #tpu.memory_space<vmem>>, vector<4x256xf32>,
    %c239_i32_92 = arith.constant 239 : i32
    %128 = tpu.dynamic_rotate %84 by %c239_i32_92 dim 1 : vector<4x256xf32>, i32 -> vector<4x256xf32>
    %c8_93 = arith.constant 8 : index
    %c0_94 = arith.constant 0 : index
    %c0_95 = arith.constant 0 : index
    %129 = vector.load %arg4[%c8_93, %c0_94, %c0_95] : memref<9x1x256xf32, #tpu.memory_space<vmem>>, vector<1x1x256xf32>
    %130 = vector.shape_cast %129 : vector<1x1x256xf32> to vector<1x256xf32>
    %131 = vector.broadcast %130 : vector<1x256xf32> to vector<4x256xf32>
    %132 = arith.mulf %128, %131 : vector<4x256xf32>
    %c32_96 = arith.constant 32 : index
    %c256_97 = arith.constant 256 : index
    %133 = vector.load %arg11[%c32_96, %c256_97] : memref<36x512xf32, #tpu.memory_space<vmem>>, vector<4x256xf32>
    tpu.vector_store %arg11[%c32_96, %c256_97], %132 {strides = array<i32>} : memref<36x512xf32, #tpu.memory_space<vmem>>, vector<4x256xf32>,
    %c0_98 = arith.constant 0 : index
    %c0_99 = arith.constant 0 : index
    %134 = vector.load %arg3[%c0_98, %c0_99] : memref<8x36xf32, #tpu.memory_space<vmem>>, vector<8x36xf32>
    %135 = vector.broadcast %28 : vector<1x1xf32> to vector<8x36xf32>
    %136 = arith.divf %134, %135 : vector<8x36xf32>
    %c0_100 = arith.constant 0 : index
    %c0_101 = arith.constant 0 : index
    %137 = vector.load %arg11[%c0_100, %c0_101] : memref<36x512xf32, #tpu.memory_space<vmem>>, vector<36x512xf32>
    %cst_102 = arith.constant dense<0.000000e+00> : vector<8x512xf32>
    %138 = tpu.matmul %136, %137, %cst_102 {dimension_numbers = #tpu.dot_dimension_numbers<[1], [0], [0], [1], [0, 0, 1, 1], [], []>} : vector<8x36xf32>, vector<36x512xf32>, vector<8x512xf32> -> vector<8x512xf32>
    %c0_103 = arith.constant 0 : index
    %c0_104 = arith.constant 0 : index
    %139 = vector.load %arg5[%c0_103, %c0_104] : memref<8x1xf32, #tpu.memory_space<vmem>>, vector<8x1xf32>
    %140 = vector.extract_strided_slice %138 {offsets = [0, 0], sizes = [8, 256], strides = [1, 1]} : vector<8x512xf32> to vector<8x256xf32>
    %141 = vector.broadcast %139 : vector<8x1xf32> to vector<8x256xf32>
    %142 = arith.addf %140, %141 : vector<8x256xf32>
    %c0_105 = arith.constant 0 : index
    %c0_106 = arith.constant 0 : index
    %c0_107 = arith.constant 0 : index
    %143 = vector.load %arg7[%c0_105, %c0_106, %c0_107] : memref<2x8x256xf32, #tpu.memory_space<vmem>>, vector<1x8x256xf32>
    %144 = vector.shape_cast %143 : vector<1x8x256xf32> to vector<8x256xf32>
    %145 = vector.shape_cast %142 : vector<8x256xf32> to vector<1x8x256xf32>
    tpu.vector_store %arg7[%c0_105, %c0_106, %c0_107], %145 {strides = array<i32>} : memref<2x8x256xf32, #tpu.memory_space<vmem>>, vector<1x8x256xf32>,
    %146 = vector.extract_strided_slice %138 {offsets = [0, 256], sizes = [8, 256], strides = [1, 1]} : vector<8x512xf32> to vector<8x256xf32>
    %147 = vector.broadcast %139 : vector<8x1xf32> to vector<8x256xf32>
    %148 = arith.addf %146, %147 : vector<8x256xf32>
    %c1_108 = arith.constant 1 : index
    %c0_109 = arith.constant 0 : index
    %c0_110 = arith.constant 0 : index
    %149 = vector.load %arg7[%c1_108, %c0_109, %c0_110] : memref<2x8x256xf32, #tpu.memory_space<vmem>>, vector<1x8x256xf32>
    %150 = vector.shape_cast %149 : vector<1x8x256xf32> to vector<8x256xf32>
    %151 = vector.shape_cast %148 : vector<8x256xf32> to vector<1x8x256xf32>
    tpu.vector_store %arg7[%c1_108, %c0_109, %c0_110], %151 {strides = array<i32>} : memref<2x8x256xf32, #tpu.memory_space<vmem>>, vector<1x8x256xf32>,
    return
  }
  func.func @transform_0(%arg0: i32) -> (i32, i32, i32) {
    %c0_i32 = arith.constant 0 : i32
    %c0_i32_0 = arith.constant 0 : i32
    %c0_i32_1 = arith.constant 0 : i32
    %c0_i32_2 = arith.constant 0 : i32
    return %c0_i32, %c0_i32_0, %c0_i32_1 : i32, i32, i32
  }
  func.func @transform_1(%arg0: i32) -> (i32, i32) {
    %c0_i32 = arith.constant 0 : i32
    %c0_i32_0 = arith.constant 0 : i32
    %c0_i32_1 = arith.constant 0 : i32
    return %c0_i32, %c0_i32_0 : i32, i32
  }
  func.func @transform_2(%arg0: i32) -> (i32, i32) {
    %c0_i32 = arith.constant 0 : i32
    %c0_i32_0 = arith.constant 0 : i32
    %c0_i32_1 = arith.constant 0 : i32
    return %c0_i32, %c0_i32_0 : i32, i32
  }
  func.func @transform_3(%arg0: i32) -> (i32, i32, i32) {
    %c0_i32 = arith.constant 0 : i32
    %c0_i32_0 = arith.constant 0 : i32
    %c0_i32_1 = arith.constant 0 : i32
    %c0_i32_2 = arith.constant 0 : i32
    return %c0_i32, %c0_i32_0, %c0_i32_1 : i32, i32, i32
  }
  func.func @transform_4(%arg0: i32) -> (i32, i32) {
    %c0_i32 = arith.constant 0 : i32
    %c0_i32_0 = arith.constant 0 : i32
    %c0_i32_1 = arith.constant 0 : i32
    return %c0_i32, %c0_i32_0 : i32, i32
  }
  func.func @transform_5(%arg0: i32) -> (i32, i32) {
    %c0_i32 = arith.constant 0 : i32
    %c0_i32_0 = arith.constant 0 : i32
    %c0_i32_1 = arith.constant 0 : i32
    return %c0_i32, %c0_i32_0 : i32, i32
  }
  func.func @transform_6(%arg0: i32) -> (i32, i32, i32) {
    %c0_i32 = arith.constant 0 : i32
    %c0_i32_0 = arith.constant 0 : i32
    %c0_i32_1 = arith.constant 0 : i32
    %c0_i32_2 = arith.constant 0 : i32
    return %c0_i32, %c0_i32_0, %c0_i32_1 : i32, i32, i32
  }
  func.func @transform_7(%arg0: i32) -> (i32, i32) {
    %c0_i32 = arith.constant 0 : i32
    %c0_i32_0 = arith.constant 0 : i32
    %c0_i32_1 = arith.constant 0 : i32
    return %c0_i32, %c0_i32_0 : i32, i32
  }
  func.func @transform_8(%arg0: i32) -> (i32, i32) {
    %c0_i32 = arith.constant 0 : i32
    %c0_i32_0 = arith.constant 0 : i32
    %c0_i32_1 = arith.constant 0 : i32
    return %c0_i32, %c0_i32_0 : i32, i32
  }
  func.func @transform_9(%arg0: i32) -> (i32, i32) {
    %c0_i32 = arith.constant 0 : i32
    %c0_i32_0 = arith.constant 0 : i32
    %c0_i32_1 = arith.constant 0 : i32
    return %c0_i32, %c0_i32_0 : i32, i32
  }
}

</mosaic_0001>

<llo_original>
// kernel: spectral_norm_conv_forward.1
$region0: #{spectral_norm_conv_forward.1}
  #allocation0 [shape = 'u32[]', space=smem, size = 0x4, offset = 0x4, fixed_abs, tag = 'smem constant byte address 0x4 - core index']
  #allocation1 [shape = 'u32[144,128]{1,0:T(1,128)}', space=vmem, size = 0x12000, scoped, tag = 'internal scratch']
  #allocation2 [shape = 'f32[36,512]{1,0:T(8,128)}', space=vmem, size = 0x14000, scoped, tag = 'scratch operand']
  %s0 = inlined_call_operand.vmem [shape: f32[2,4,256], index: 0, kind: input, shape index: {}]
  %s1 = inlined_call_operand.vmem [shape: f32[8,36], index: 1, kind: input, shape index: {}]
  %s2 = inlined_call_operand.vmem [shape: f32[8,36], index: 2, kind: input, shape index: {}]
  %s3 = inlined_call_operand.vmem [shape: f32[9,1,256], index: 3, kind: input, shape index: {}]
  %s4 = inlined_call_operand.vmem [shape: f32[8,1], index: 4, kind: input, shape index: {}]
  %s5 = inlined_call_operand.vmem [shape: f32[8,1], index: 5, kind: input, shape index: {}]
  %s6 = inlined_call_operand.vmem [shape: f32[2,8,256], index: 6, kind: output, shape index: {0}]
  %s7 = inlined_call_operand.vmem [shape: f32[8,1], index: 7, kind: output, shape index: {1}]
  %s8 = inlined_call_operand.hbm [shape: f32[1,36], index: 8, kind: output, shape index: {2}]
  %s9 = inlined_call_operand.hbm [shape: f32[1,1], index: 9, kind: output, shape index: {3}]
  %10 = xla_tuple %s6, %s7, %s8, %s9
  %s11 = sld [smem:[#allocation0]]
  $region58: #{spectral_norm_conv_forward.1} parent=0
    _
  %s13 = ssub.s32 1, %s11
  %s14 = scalar_select 0, %s13, %s11
  $region1: #{spectral_norm_conv_forward.1} parent=0
    #allocation3 [shape = 'u8[512]{0}', space=vmem, size = 0x400, scoped, tag = 'output window, operand 2, single buffered']
    #allocation4 [shape = 's32[1]{0}', space=sflag, size = 0x4, scoped, tag = 'scoped memory for spectral_norm_conv_forward.1']
    #allocation5 [shape = 'u8[512]{0}', space=vmem, size = 0x400, scoped, tag = 'output window, operand 3, single buffered']
    #allocation6 [shape = 's32[1]{0}', space=sflag, size = 0x4, scoped, tag = 'scoped memory for spectral_norm_conv_forward.1']
    %15 = vsyncpa [#allocation4], 0
    %16 = vsyncpa [#allocation6], 0
    // Predicated region
    $region2: #{spectral_norm_conv_forward.1} parent=1 // pred_check
      _
    $region3: #{spectral_norm_conv_forward.1} parent=1 // pred_check_branch
      %18 = sbr.rel (0) target = $region5
    $region4: #{spectral_norm_conv_forward.1} parent=1 // pred_region
      _
    $region5: #{spectral_norm_conv_forward.1} parent=1 // pred_fallthru
      _
    // Predicated region
    $region6: #{spectral_norm_conv_forward.1} parent=1 // pred_check
      _
    $region7: #{spectral_norm_conv_forward.1} parent=1 // pred_check_branch
      %20 = sbr.rel (0) target = $region9
    $region8: #{spectral_norm_conv_forward.1} parent=1 // pred_region
      _
    $region9: #{spectral_norm_conv_forward.1} parent=1 // pred_fallthru
      _
    // Predicated region
    $region10: #{spectral_norm_conv_forward.1} parent=1 // pred_check
      _
    $region11: #{spectral_norm_conv_forward.1} parent=1 // pred_check_branch
      %22 = sbr.rel (0) target = $region13
    $region12: #{spectral_norm_conv_forward.1} parent=1 // pred_region
      _
    $region13: #{spectral_norm_conv_forward.1} parent=1 // pred_fallthru
      _
    // Predicated region
    $region14: #{spectral_norm_conv_forward.1} parent=1 // pred_check
      _
    $region15: #{spectral_norm_conv_forward.1} parent=1 // pred_check_branch
      %24 = sbr.rel (0) target = $region17
    $region16: #{spectral_norm_conv_forward.1} parent=1 // pred_region
      _
    $region17: #{spectral_norm_conv_forward.1} parent=1 // pred_fallthru
      _
    // Predicated region
    $region18: #{spectral_norm_conv_forward.1} parent=1 // pred_check
      _
    $region19: #{spectral_norm_conv_forward.1} parent=1 // pred_check_branch
      %26 = sbr.rel (0) target = $region21
    $region20: #{spectral_norm_conv_forward.1} parent=1 // pred_region
      _
    $region21: #{spectral_norm_conv_forward.1} parent=1 // pred_fallthru
      _
    // Predicated region
    $region22: #{spectral_norm_conv_forward.1} parent=1 // pred_check
      _
    $region23: #{spectral_norm_conv_forward.1} parent=1 // pred_check_branch
      %28 = sbr.rel (0) target = $region25
    $region24: #{spectral_norm_conv_forward.1} parent=1 // pred_region
      _
    $region25: #{spectral_norm_conv_forward.1} parent=1 // pred_fallthru
      _
    %v29 = vld [vmem:[%s1] sm:$0xff]
    %v30 = vld [vmem:[%s5] sm:$0xff]
    %32 = vset.pattern.permute.xlu0 0
    %33 = vperm.xlu0 %32, %v30
    %v34 = vpop.permute.xlu0 %33
    %v36 = vmul.f32 %v29, %v34
    %vm37 = vcmask 293888
    %v38 = vsel %vm37, %v36, 0.0
    %v39 = vrot.slane %v38, 4
    %v40 = vadd.f32 %v38, %v39
    %v41 = vrot.slane %v40, 2
    %v42 = vadd.f32 %v40, %v41
    %v43 = vrot.slane %v42, 1
    %v44 = vadd.f32 %v42, %v43
    %v45 = vmul.f32 %v44, %v44
    %v46 = vsel %vm37, %v45, 0.0
    %47 = vadd.xlane.f32.xlu0 %v46
    %v48 = vpop.xlane.xlu0 %47
    %v49 = vrsqrt.pop %v48
    %v50 = vmul.f32 %v48, %v49
    %vm51 = vcmp.eq.f32.partialorder %v48, inf
    %v52 = vsel %vm51, %v48, %v50
    %vm53 = vcmp.eq.f32.partialorder %v48, 0.0
    %v54 = vand.u32 %v48, 2147483648
    %v55 = vsel %vm53, %v54, %v52
    %v56 = vmax.f32 %v55, 1e-12
    %v57 = vrcp.pop %v56
    %v58 = vmul.f32 %v44, %v57
    %v59 = vmul.f32 %v29, %v58
    %v60 = vsel %vm37, %v59, 0.0
    %61 = vadd.xlane.f32.xlu0 %v60
    %v62 = vpop.xlane.xlu0 %61
    %v63 = vmul.f32 %v62, %v62
    %v64 = vrot.slane %v63, 4
    %v65 = vadd.f32 %v63, %v64
    %v66 = vrot.slane %v65, 2
    %v67 = vadd.f32 %v65, %v66
    %v68 = vrot.slane %v67, 1
    %v69 = vadd.f32 %v67, %v68
    %v70 = vrsqrt.pop %v69
    %v71 = vmul.f32 %v69, %v70
    %vm72 = vcmp.eq.f32.partialorder %v69, inf
    %v73 = vsel %vm72, %v69, %v71
    %vm74 = vcmp.eq.f32.partialorder %v69, 0.0
    %v75 = vand.u32 %v69, 2147483648
    %v76 = vsel %vm74, %v75, %v73
    %v77 = vmax.f32 %v76, 1e-12
    %v78 = vrcp.pop %v77
    %v79 = vmul.f32 %v62, %v78
    %v80 = vmul.f32 %v79, %v62
    %v81 = vrot.slane %v80, 4
    %v82 = vadd.f32 %v80, %v81
    %v83 = vrot.slane %v82, 2
    %v84 = vadd.f32 %v82, %v83
    %v85 = vrot.slane %v84, 1
    %v86 = vadd.f32 %v84, %v85
    %vm87 = vcmask 7168
    %88 = vst.msk [vmem:[%s7] sm:$0xff] %vm87, %v79
    %vm89 = vcmask 286720
    %90 = vst.msk [vmem:[#allocation3] sm:$0x1] %vm89, %v58
    %vm91 = vcmask 0
    %92 = vst.msk [vmem:[#allocation5] sm:$0x1] %vm91, %v86
    %v93 = vld [vmem:[%s0] sm:$0xff]
    %v95 = vcombine.high %v93, %v93
    %97 = vrot.lane.b32.xlu0 %v93, 17
    %v98 = vpop.permute.xlu0 %97
    %99 = vrot.lane.b32.xlu0 %v95, 17
    %v100 = vpop.permute.xlu0 %99
    %v101 = vlaneseq
    %v102 = vand.u32 %v101, 127
    %vm103 = vcmp.lt.s32.totalorder %v102, 17
    %v104 = vsel %vm103, %v98, %v100
    %v105 = vsel %vm103, %v100, %v98
    %v106 = vld [vmem:[%s3] sm:$0x3]
    %v108 = vlaneseq
    %v109 = vshrl.u32 %v108, 7
    %v110 = vsub.s32 0, %v109
    %v111 = vrot.slane %v106, %v110
    %v112 = vlaneseq
    %v113 = vshrl.u32 %v112, 7
    %v114 = vsub.s32 1, %v113
    %v115 = vrot.slane %v106, %v114
    %v118 = vmul.f32 %v105, %v111
    %v119 = vmul.f32 %v104, %v115
    %120 = vst [vmem:[#allocation2] sm:$0xf] %v118
    %121 = vst [vmem:[#allocation2 + $0x8] sm:$0xf] %v119
    %122 = vrot.lane.b32.xlu0 %v93, 16
    %v123 = vpop.permute.xlu0 %122
    %124 = vrot.lane.b32.xlu0 %v95, 16
    %v125 = vpop.permute.xlu0 %124
    %vm126 = vcmp.lt.s32.totalorder %v102, 16
    %v127 = vsel %vm126, %v123, %v125
    %v128 = vsel %vm126, %v125, %v123
    %s129 = scalar_lea.vmem %s3, 2
    %v130 = vld [vmem:[%s129] sm:$0x3]
    %v132 = vlaneseq
    %v133 = vshrl.u32 %v132, 7
    %v134 = vsub.s32 0, %v133
    %v135 = vrot.slane %v130, %v134
    %v136 = vlaneseq
    %v137 = vshrl.u32 %v136, 7
    %v138 = vsub.s32 1, %v137
    %v139 = vrot.slane %v130, %v138
    %v142 = vmul.f32 %v128, %v135
    %v143 = vmul.f32 %v127, %v139
    %v146 = vrot.slane %v142, 4
    %v147 = vrot.slane %v143, 4
    %150 = vst [vmem:[#allocation2] sm:$0xf0] %v146
    %151 = vst [vmem:[#allocation2 + $0x8] sm:$0xf0] %v147
    %152 = vrot.lane.b32.xlu0 %v93, 15
    %v153 = vpop.permute.xlu0 %152
    %154 = vrot.lane.b32.xlu0 %v95, 15
    %v155 = vpop.permute.xlu0 %154
    %vm156 = vcmp.lt.s32.totalorder %v102, 15
    %v157 = vsel %vm156, %v153, %v155
    %v158 = vsel %vm156, %v155, %v153
    %s159 = scalar_lea.vmem %s3, 4
    %v160 = vld [vmem:[%s159] sm:$0x3]
    %v162 = vlaneseq
    %v163 = vshrl.u32 %v162, 7
    %v164 = vsub.s32 0, %v163
    %v165 = vrot.slane %v160, %v164
    %v166 = vlaneseq
    %v167 = vshrl.u32 %v166, 7
    %v168 = vsub.s32 1, %v167
    %v169 = vrot.slane %v160, %v168
    %v172 = vmul.f32 %v158, %v165
    %v173 = vmul.f32 %v157, %v169
    %174 = vst [vmem:[#allocation2 + $0x20] sm:$0xf] %v172
    %175 = vst [vmem:[#allocation2 + $0x28] sm:$0xf] %v173
    %176 = vrot.lane.b32.xlu0 %v93, 1
    %v177 = vpop.permute.xlu0 %176
    %178 = vrot.lane.b32.xlu0 %v95, 1
    %v179 = vpop.permute.xlu0 %178
    %vm180 = vcmp.lt.s32.totalorder %v102, 1
    %v181 = vsel %vm180, %v177, %v179
    %v182 = vsel %vm180, %v179, %v177
    %s183 = scalar_lea.vmem %s3, 6
    %v184 = vld [vmem:[%s183] sm:$0x3]
    %v186 = vlaneseq
    %v187 = vshrl.u32 %v186, 7
    %v188 = vsub.s32 0, %v187
    %v189 = vrot.slane %v184, %v188
    %v190 = vlaneseq
    %v191 = vshrl.u32 %v190, 7
    %v192 = vsub.s32 1, %v191
    %v193 = vrot.slane %v184, %v192
    %v196 = vmul.f32 %v182, %v189
    %v197 = vmul.f32 %v181, %v193
    %v200 = vrot.slane %v196, 4
    %v201 = vrot.slane %v197, 4
    %204 = vst [vmem:[#allocation2 + $0x20] sm:$0xf0] %v200
    %205 = vst [vmem:[#allocation2 + $0x28] sm:$0xf0] %v201
    %206 = vst [vmem:[#allocation2 + $0x40] sm:$0xf] %v93
    %207 = vst [vmem:[#allocation2 + $0x48] sm:$0xf] %v95
    %208 = vrot.lane.b32.xlu0 %v93, 127
    %v209 = vpop.permute.xlu0 %208
    %210 = vrot.lane.b32.xlu0 %v95, 127
    %v211 = vpop.permute.xlu0 %210
    %vm212 = vcmp.lt.s32.totalorder %v102, 127
    %v213 = vsel %vm212, %v209, %v211
    %v214 = vsel %vm212, %v211, %v209
    %s215 = scalar_lea.vmem %s3, 10
    %v216 = vld [vmem:[%s215] sm:$0x3]
    %v218 = vlaneseq
    %v219 = vshrl.u32 %v218, 7
    %v220 = vsub.s32 0, %v219
    %v221 = vrot.slane %v216, %v220
    %v222 = vlaneseq
    %v223 = vshrl.u32 %v222, 7
    %v224 = vsub.s32 1, %v223
    %v225 = vrot.slane %v216, %v224
    %v228 = vmul.f32 %v213, %v221
    %v229 = vmul.f32 %v214, %v225
    %v232 = vrot.slane %v228, 4
    %v233 = vrot.slane %v229, 4
    %236 = vst [vmem:[#allocation2 + $0x40] sm:$0xf0] %v232
    %237 = vst [vmem:[#allocation2 + $0x48] sm:$0xf0] %v233
    %238 = vrot.lane.b32.xlu0 %v93, 113
    %v239 = vpop.permute.xlu0 %238
    %240 = vrot.lane.b32.xlu0 %v95, 113
    %v241 = vpop.permute.xlu0 %240
    %vm242 = vcmp.lt.s32.totalorder %v102, 113
    %v243 = vsel %vm242, %v239, %v241
    %v244 = vsel %vm242, %v241, %v239
    %s245 = scalar_lea.vmem %s3, 12
    %v246 = vld [vmem:[%s245] sm:$0x3]
    %v248 = vlaneseq
    %v249 = vshrl.u32 %v248, 7
    %v250 = vsub.s32 0, %v249
    %v251 = vrot.slane %v246, %v250
    %v252 = vlaneseq
    %v253 = vshrl.u32 %v252, 7
    %v254 = vsub.s32 1, %v253
    %v255 = vrot.slane %v246, %v254
    %v258 = vmul.f32 %v243, %v251
    %v259 = vmul.f32 %v244, %v255
    %260 = vst [vmem:[#allocation2 + $0x60] sm:$0xf] %v258
    %261 = vst [vmem:[#allocation2 + $0x68] sm:$0xf] %v259
    %262 = vrot.lane.b32.xlu0 %v93, 112
    %v263 = vpop.permute.xlu0 %262
    %264 = vrot.lane.b32.xlu0 %v95, 112
    %v265 = vpop.permute.xlu0 %264
    %vm266 = vcmp.lt.s32.totalorder %v102, 112
    %v267 = vsel %vm266, %v263, %v265
    %v268 = vsel %vm266, %v265, %v263
    %s269 = scalar_lea.vmem %s3, 14
    %v270 = vld [vmem:[%s269] sm:$0x3]
    %v272 = vlaneseq
    %v273 = vshrl.u32 %v272, 7
    %v274 = vsub.s32 0, %v273
    %v275 = vrot.slane %v270, %v274
    %v276 = vlaneseq
    %v277 = vshrl.u32 %v276, 7
    %v278 = vsub.s32 1, %v277
    %v279 = vrot.slane %v270, %v278
    %v282 = vmul.f32 %v267, %v275
    %v283 = vmul.f32 %v268, %v279
    %v286 = vrot.slane %v282, 4
    %v287 = vrot.slane %v283, 4
    %290 = vst [vmem:[#allocation2 + $0x60] sm:$0xf0] %v286
    %291 = vst [vmem:[#allocation2 + $0x68] sm:$0xf0] %v287
    %292 = vrot.lane.b32.xlu0 %v93, 111
    %v293 = vpop.permute.xlu0 %292
    %294 = vrot.lane.b32.xlu0 %v95, 111
    %v295 = vpop.permute.xlu0 %294
    %vm296 = vcmp.lt.s32.totalorder %v102, 111
    %v297 = vsel %vm296, %v293, %v295
    %v298 = vsel %vm296, %v295, %v293
    %s299 = scalar_lea.vmem %s3, 16
    %v300 = vld [vmem:[%s299] sm:$0x3]
    %v302 = vlaneseq
    %v303 = vshrl.u32 %v302, 7
    %v304 = vsub.s32 0, %v303
    %v305 = vrot.slane %v300, %v304
    %v306 = vlaneseq
    %v307 = vshrl.u32 %v306, 7
    %v308 = vsub.s32 1, %v307
    %v309 = vrot.slane %v300, %v308
    %v312 = vmul.f32 %v297, %v305
    %v313 = vmul.f32 %v298, %v309
    %314 = vst [vmem:[#allocation2 + $0x80] sm:$0xf] %v312
    %315 = vst [vmem:[#allocation2 + $0x88] sm:$0xf] %v313
    %s316 = scalar_lea.vmem %s0, 8
    %v317 = vld [vmem:[%s316] sm:$0xff]
    %v319 = vcombine.high %v317, %v317
    %321 = vrot.lane.b32.xlu0 %v317, 17
    %v322 = vpop.permute.xlu0 %321
    %323 = vrot.lane.b32.xlu0 %v319, 17
    %v324 = vpop.permute.xlu0 %323
    %v325 = vsel %vm103, %v322, %v324
    %v326 = vsel %vm103, %v324, %v322
    %v327 = vld [vmem:[%s3] sm:$0x3]
    %v329 = vlaneseq
    %v330 = vshrl.u32 %v329, 7
    %v331 = vsub.s32 0, %v330
    %v332 = vrot.slane %v327, %v331
    %v333 = vlaneseq
    %v334 = vshrl.u32 %v333, 7
    %v335 = vsub.s32 1, %v334
    %v336 = vrot.slane %v327, %v335
    %v339 = vmul.f32 %v326, %v332
    %v340 = vmul.f32 %v325, %v336
    %341 = vst [vmem:[#allocation2 + $0x10] sm:$0xf] %v339
    %342 = vst [vmem:[#allocation2 + $0x18] sm:$0xf] %v340
    %343 = vrot.lane.b32.xlu0 %v317, 16
    %v344 = vpop.permute.xlu0 %343
    %345 = vrot.lane.b32.xlu0 %v319, 16
    %v346 = vpop.permute.xlu0 %345
    %v347 = vsel %vm126, %v344, %v346
    %v348 = vsel %vm126, %v346, %v344
    %v349 = vld [vmem:[%s129] sm:$0x3]
    %v351 = vlaneseq
    %v352 = vshrl.u32 %v351, 7
    %v353 = vsub.s32 0, %v352
    %v354 = vrot.slane %v349, %v353
    %v355 = vlaneseq
    %v356 = vshrl.u32 %v355, 7
    %v357 = vsub.s32 1, %v356
    %v358 = vrot.slane %v349, %v357
    %v361 = vmul.f32 %v348, %v354
    %v362 = vmul.f32 %v347, %v358
    %v365 = vrot.slane %v361, 4
    %v366 = vrot.slane %v362, 4
    %369 = vst [vmem:[#allocation2 + $0x10] sm:$0xf0] %v365
    %370 = vst [vmem:[#allocation2 + $0x18] sm:$0xf0] %v366
    %371 = vrot.lane.b32.xlu0 %v317, 15
    %v372 = vpop.permute.xlu0 %371
    %373 = vrot.lane.b32.xlu0 %v319, 15
    %v374 = vpop.permute.xlu0 %373
    %v375 = vsel %vm156, %v372, %v374
    %v376 = vsel %vm156, %v374, %v372
    %v377 = vld [vmem:[%s159] sm:$0x3]
    %v379 = vlaneseq
    %v380 = vshrl.u32 %v379, 7
    %v381 = vsub.s32 0, %v380
    %v382 = vrot.slane %v377, %v381
    %v383 = vlaneseq
    %v384 = vshrl.u32 %v383, 7
    %v385 = vsub.s32 1, %v384
    %v386 = vrot.slane %v377, %v385
    %v389 = vmul.f32 %v376, %v382
    %v390 = vmul.f32 %v375, %v386
    %391 = vst [vmem:[#allocation2 + $0x30] sm:$0xf] %v389
    %392 = vst [vmem:[#allocation2 + $0x38] sm:$0xf] %v390
    %393 = vrot.lane.b32.xlu0 %v317, 1
    %v394 = vpop.permute.xlu0 %393
    %395 = vrot.lane.b32.xlu0 %v319, 1
    %v396 = vpop.permute.xlu0 %395
    %v397 = vsel %vm180, %v394, %v396
    %v398 = vsel %vm180, %v396, %v394
    %v399 = vld [vmem:[%s183] sm:$0x3]
    %v401 = vlaneseq
    %v402 = vshrl.u32 %v401, 7
    %v403 = vsub.s32 0, %v402
    %v404 = vrot.slane %v399, %v403
    %v405 = vlaneseq
    %v406 = vshrl.u32 %v405, 7
    %v407 = vsub.s32 1, %v406
    %v408 = vrot.slane %v399, %v407
    %v411 = vmul.f32 %v398, %v404
    %v412 = vmul.f32 %v397, %v408
    %v415 = vrot.slane %v411, 4
    %v416 = vrot.slane %v412, 4
    %419 = vst [vmem:[#allocation2 + $0x30] sm:$0xf0] %v415
    %420 = vst [vmem:[#allocation2 + $0x38] sm:$0xf0] %v416
    %421 = vst [vmem:[#allocation2 + $0x50] sm:$0xf] %v317
    %422 = vst [vmem:[#allocation2 + $0x58] sm:$0xf] %v319
    %423 = vrot.lane.b32.xlu0 %v317, 127
    %v424 = vpop.permute.xlu0 %423
    %425 = vrot.lane.b32.xlu0 %v319, 127
    %v426 = vpop.permute.xlu0 %425
    %v427 = vsel %vm212, %v424, %v426
    %v428 = vsel %vm212, %v426, %v424
    %v429 = vld [vmem:[%s215] sm:$0x3]
    %v431 = vlaneseq
    %v432 = vshrl.u32 %v431, 7
    %v433 = vsub.s32 0, %v432
    %v434 = vrot.slane %v429, %v433
    %v435 = vlaneseq
    %v436 = vshrl.u32 %v435, 7
    %v437 = vsub.s32 1, %v436
    %v438 = vrot.slane %v429, %v437
    %v441 = vmul.f32 %v427, %v434
    %v442 = vmul.f32 %v428, %v438
    %v445 = vrot.slane %v441, 4
    %v446 = vrot.slane %v442, 4
    %449 = vst [vmem:[#allocation2 + $0x50] sm:$0xf0] %v445
    %450 = vst [vmem:[#allocation2 + $0x58] sm:$0xf0] %v446
    %451 = vrot.lane.b32.xlu0 %v317, 113
    %v452 = vpop.permute.xlu0 %451
    %453 = vrot.lane.b32.xlu0 %v319, 113
    %v454 = vpop.permute.xlu0 %453
    %v455 = vsel %vm242, %v452, %v454
    %v456 = vsel %vm242, %v454, %v452
    %v457 = vld [vmem:[%s245] sm:$0x3]
    %v459 = vlaneseq
    %v460 = vshrl.u32 %v459, 7
    %v461 = vsub.s32 0, %v460
    %v462 = vrot.slane %v457, %v461
    %v463 = vlaneseq
    %v464 = vshrl.u32 %v463, 7
    %v465 = vsub.s32 1, %v464
    %v466 = vrot.slane %v457, %v465
    %v469 = vmul.f32 %v455, %v462
    %v470 = vmul.f32 %v456, %v466
    %471 = vst [vmem:[#allocation2 + $0x70] sm:$0xf] %v469
    %472 = vst [vmem:[#allocation2 + $0x78] sm:$0xf] %v470
    %473 = vrot.lane.b32.xlu0 %v317, 112
    %v474 = vpop.permute.xlu0 %473
    %475 = vrot.lane.b32.xlu0 %v319, 112
    %v476 = vpop.permute.xlu0 %475
    %v477 = vsel %vm266, %v474, %v476
    %v478 = vsel %vm266, %v476, %v474
    %v479 = vld [vmem:[%s269] sm:$0x3]
    %v481 = vlaneseq
    %v482 = vshrl.u32 %v481, 7
    %v483 = vsub.s32 0, %v482
    %v484 = vrot.slane %v479, %v483
    %v485 = vlaneseq
    %v486 = vshrl.u32 %v485, 7
    %v487 = vsub.s32 1, %v486
    %v488 = vrot.slane %v479, %v487
    %v491 = vmul.f32 %v477, %v484
    %v492 = vmul.f32 %v478, %v488
    %v495 = vrot.slane %v491, 4
    %v496 = vrot.slane %v492, 4
    %499 = vst [vmem:[#allocation2 + $0x70] sm:$0xf0] %v495
    %500 = vst [vmem:[#allocation2 + $0x78] sm:$0xf0] %v496
    %501 = vrot.lane.b32.xlu0 %v317, 111
    %v502 = vpop.permute.xlu0 %501
    %503 = vrot.lane.b32.xlu0 %v319, 111
    %v504 = vpop.permute.xlu0 %503
    %v505 = vsel %vm296, %v502, %v504
    %v506 = vsel %vm296, %v504, %v502
    %v507 = vld [vmem:[%s299] sm:$0x3]
    %v509 = vlaneseq
    %v510 = vshrl.u32 %v509, 7
    %v511 = vsub.s32 0, %v510
    %v512 = vrot.slane %v507, %v511
    %v513 = vlaneseq
    %v514 = vshrl.u32 %v513, 7
    %v515 = vsub.s32 1, %v514
    %v516 = vrot.slane %v507, %v515
    %v519 = vmul.f32 %v505, %v512
    %v520 = vmul.f32 %v506, %v516
    %521 = vst [vmem:[#allocation2 + $0x90] sm:$0xf] %v519
    %522 = vst [vmem:[#allocation2 + $0x98] sm:$0xf] %v520
    %v523 = vld [vmem:[%s2] sm:$0xff]
    %v524 = vrcp.pop %v86
    %v525 = vmul.f32 %v523, %v524
    %v526 = vld [vmem:[#allocation2] sm:$0xff]
    %v527 = vld [vmem:[#allocation2 + $0x8] sm:$0xff]
    %v528 = vld [vmem:[#allocation2 + $0x10] sm:$0xff]
    %v529 = vld [vmem:[#allocation2 + $0x18] sm:$0xff]
    %v530 = vld [vmem:[#allocation2 + $0x20] sm:$0xff]
    %v531 = vld [vmem:[#allocation2 + $0x28] sm:$0xff]
    %v532 = vld [vmem:[#allocation2 + $0x30] sm:$0xff]
    %v533 = vld [vmem:[#allocation2 + $0x38] sm:$0xff]
    %v534 = vld [vmem:[#allocation2 + $0x40] sm:$0xff]
    %v535 = vld [vmem:[#allocation2 + $0x48] sm:$0xff]
    %v536 = vld [vmem:[#allocation2 + $0x50] sm:$0xff]
    %v537 = vld [vmem:[#allocation2 + $0x58] sm:$0xff]
    %v538 = vld [vmem:[#allocation2 + $0x60] sm:$0xff]
    %v539 = vld [vmem:[#allocation2 + $0x68] sm:$0xff]
    %v540 = vld [vmem:[#allocation2 + $0x70] sm:$0xff]
    %v541 = vld [vmem:[#allocation2 + $0x78] sm:$0xff]
    %v542 = vld [vmem:[#allocation2 + $0x80] sm:$0xf]
    %v543 = vld [vmem:[#allocation2 + $0x88] sm:$0xf]
    %v544 = vld [vmem:[#allocation2 + $0x90] sm:$0xf]
    %v545 = vld [vmem:[#allocation2 + $0x98] sm:$0xf]
    %v547 = vsel %vm37, %v525, 0
    %vm549 = vcmask 1043456
    %v551 = vsel %vm549, %v542, 0
    %v554 = vsel %vm549, %v543, 0
    %v557 = vsel %vm549, %v544, 0
    %v560 = vsel %vm549, %v545, 0
    %562 = vmatprep.subr.mxu0 0.0
    %563 = vmatpush1.msra.mxu0 0.0
    %564 = vmatprep.subr.mxu0 0.0
    %565 = vmatpush1.msra.mxu0 0.0
    %566 = vmatprep.subr.mxu0 0.0
    %567 = vmatpush1.msra.mxu0 0.0
    %568 = vmatprep.subr.mxu0 0.0
    %569 = vmatpush1.msra.mxu0 0.0
    %570 = vmatprep.subr.mxu0 0.0
    %571 = vmatpush1.msra.mxu0 0.0
    %572 = vmatprep.subr.mxu0 0.0
    %573 = vmatpush1.msra.mxu0 0.0
    %574 = vmatprep.subr.mxu0 0.0
    %575 = vmatpush1.msra.mxu0 0.0
    %576 = vmatprep.subr.mxu0 0.0
    %577 = vmatpush1.msra.mxu0 0.0
    %578 = vmatprep.subr.mxu0 0.0
    %579 = vmatpush1.msra.mxu0 0.0
    %580 = vmatprep.subr.mxu0 0.0
    %581 = vmatpush1.msra.mxu0 0.0
    %582 = vmatprep.subr.mxu0 0.0
    %583 = vmatpush1.msra.mxu0 0.0
    %584 = vmatprep.subr.mxu0 %v554
    %585 = vmatpush1.msra.mxu0 %v551
    %586 = vmatprep.subr.mxu0 %v539
    %587 = vmatpush1.msra.mxu0 %v538
    %588 = vmatprep.subr.mxu0 %v535
    %589 = vmatpush1.msra.mxu0 %v534
    %590 = vmatprep.subr.mxu0 %v531
    %591 = vmatpush1.msra.mxu0 %v530
    %592 = vmatprep.subr.mxu0 %v527
    %593 = vmatpush1.msra.mxu0 %v526
    %594 = vmatprep.subr.mxu0 0.0
    %595 = vmatpush2.msra.mxu0 0.0
    %596 = vmatprep.subr.mxu0 0.0
    %597 = vmatpush2.msra.mxu0 0.0
    %598 = vmatprep.subr.mxu0 0.0
    %599 = vmatpush2.msra.mxu0 0.0
    %600 = vmatprep.subr.mxu0 0.0
    %601 = vmatpush2.msra.mxu0 0.0
    %602 = vmatprep.subr.mxu0 0.0
    %603 = vmatpush2.msra.mxu0 0.0
    %604 = vmatprep.subr.mxu0 0.0
    %605 = vmatpush2.msra.mxu0 0.0
    %606 = vmatprep.subr.mxu0 0.0
    %607 = vmatpush2.msra.mxu0 0.0
    %608 = vmatprep.subr.mxu0 0.0
    %609 = vmatpush2.msra.mxu0 0.0
    %610 = vmatprep.subr.mxu0 0.0
    %611 = vmatpush2.msra.mxu0 0.0
    %612 = vmatprep.subr.mxu0 0.0
    %613 = vmatpush2.msra.mxu0 0.0
    %614 = vmatprep.subr.mxu0 0.0
    %615 = vmatpush2.msra.mxu0 0.0
    %616 = vmatprep.subr.mxu0 0.0
    %617 = vmatpush2.msra.mxu0 0.0
    %618 = vmatprep.subr.mxu0 0.0
    %619 = vmatpush2.msra.mxu0 0.0
    %620 = vmatprep.subr.mxu0 0.0
    %621 = vmatpush2.msra.mxu0 0.0
    %622 = vmatprep.subr.mxu0 0.0
    %623 = vmatpush2.msra.mxu0 0.0
    %624 = vmatprep.subr.mxu0 0.0
    %625 = vmatpush2.msra.mxu0 0.0
    %626 = vmatprep.mubr.f32.mxu0 0.0
    %627 = vmatmul.mubr.f32.gmra.mxu0 %v547
    %v628 = vpop.f32.mrf.mxu0
    %v629 = vadd.f32 0.0, %v628
    %v630 = vpop.f32.mrf.mxu0
    %v631 = vadd.f32 0.0, %v630
    %632 = vdwg.mxu0
    %633 = vmatprep.subr.mxu0 0.0
    %634 = vmatpush1.msra.mxu0 0.0
    %635 = vmatprep.subr.mxu0 0.0
    %636 = vmatpush1.msra.mxu0 0.0
    %637 = vmatprep.subr.mxu0 0.0
    %638 = vmatpush1.msra.mxu0 0.0
    %639 = vmatprep.subr.mxu0 0.0
    %640 = vmatpush1.msra.mxu0 0.0
    %641 = vmatprep.subr.mxu0 0.0
    %642 = vmatpush1.msra.mxu0 0.0
    %643 = vmatprep.subr.mxu0 0.0
    %644 = vmatpush1.msra.mxu0 0.0
    %645 = vmatprep.subr.mxu0 0.0
    %646 = vmatpush1.msra.mxu0 0.0
    %647 = vmatprep.subr.mxu0 0.0
    %648 = vmatpush1.msra.mxu0 0.0
    %649 = vmatprep.subr.mxu0 0.0
    %650 = vmatpush1.msra.mxu0 0.0
    %651 = vmatprep.subr.mxu0 0.0
    %652 = vmatpush1.msra.mxu0 0.0
    %653 = vmatprep.subr.mxu0 0.0
    %654 = vmatpush1.msra.mxu0 0.0
    %655 = vmatprep.subr.mxu0 %v560
    %656 = vmatpush1.msra.mxu0 %v557
    %657 = vmatprep.subr.mxu0 %v541
    %658 = vmatpush1.msra.mxu0 %v540
    %659 = vmatprep.subr.mxu0 %v537
    %660 = vmatpush1.msra.mxu0 %v536
    %661 = vmatprep.subr.mxu0 %v533
    %662 = vmatpush1.msra.mxu0 %v532
    %663 = vmatprep.subr.mxu0 %v529
    %664 = vmatpush1.msra.mxu0 %v528
    %665 = vmatprep.subr.mxu0 0.0
    %666 = vmatpush2.msra.mxu0 0.0
    %667 = vmatprep.subr.mxu0 0.0
    %668 = vmatpush2.msra.mxu0 0.0
    %669 = vmatprep.subr.mxu0 0.0
    %670 = vmatpush2.msra.mxu0 0.0
    %671 = vmatprep.subr.mxu0 0.0
    %672 = vmatpush2.msra.mxu0 0.0
    %673 = vmatprep.subr.mxu0 0.0
    %674 = vmatpush2.msra.mxu0 0.0
    %675 = vmatprep.subr.mxu0 0.0
    %676 = vmatpush2.msra.mxu0 0.0
    %677 = vmatprep.subr.mxu0 0.0
    %678 = vmatpush2.msra.mxu0 0.0
    %679 = vmatprep.subr.mxu0 0.0
    %680 = vmatpush2.msra.mxu0 0.0
    %681 = vmatprep.subr.mxu0 0.0
    %682 = vmatpush2.msra.mxu0 0.0
    %683 = vmatprep.subr.mxu0 0.0
    %684 = vmatpush2.msra.mxu0 0.0
    %685 = vmatprep.subr.mxu0 0.0
    %686 = vmatpush2.msra.mxu0 0.0
    %687 = vmatprep.subr.mxu0 0.0
    %688 = vmatpush2.msra.mxu0 0.0
    %689 = vmatprep.subr.mxu0 0.0
    %690 = vmatpush2.msra.mxu0 0.0
    %691 = vmatprep.subr.mxu0 0.0
    %692 = vmatpush2.msra.mxu0 0.0
    %693 = vmatprep.subr.mxu0 0.0
    %694 = vmatpush2.msra.mxu0 0.0
    %695 = vmatprep.subr.mxu0 0.0
    %696 = vmatpush2.msra.mxu0 0.0
    %697 = vmatprep.mubr.f32.mxu0 0.0
    %698 = vmatmul.mubr.f32.gmra.mxu0 %v547
    %v699 = vpop.f32.mrf.mxu0
    %v700 = vadd.f32 0.0, %v699
    %v701 = vpop.f32.mrf.mxu0
    %v702 = vadd.f32 0.0, %v701
    %703 = vdwg.mxu0
    %v704 = vld [vmem:[%s4] sm:$0xff]
    %706 = vset.pattern.permute.xlu0 0
    %707 = vperm.xlu0 %706, %v704
    %v708 = vpop.permute.xlu0 %707
    %v710 = vadd.f32 %v629, %v708
    %v711 = vadd.f32 %v631, %v708
    %712 = vst [vmem:[%s6] sm:$0xff] %v710
    %713 = vst [vmem:[%s6 + $0x8] sm:$0xff] %v711
    %v714 = vadd.f32 %v700, %v708
    %v715 = vadd.f32 %v702, %v708
    %s716 = scalar_lea.vmem %s6, 16
    %717 = vst [vmem:[%s716] sm:$0xff] %v714
    %718 = vst [vmem:[%s716 + $0x8] sm:$0xff] %v715
    // Predicated region
    $region26: #{spectral_norm_conv_forward.1} parent=1 // pred_check
      _
    $region27: #{spectral_norm_conv_forward.1} parent=1 // pred_check_branch
      %720 = sbr.rel (0) target = $region29
    $region28: #{spectral_norm_conv_forward.1} parent=1 // pred_region
      _
    $region29: #{spectral_norm_conv_forward.1} parent=1 // pred_fallthru
      _
    // Predicated region
    $region30: #{spectral_norm_conv_forward.1} parent=1 // pred_check
      _
    $region31: #{spectral_norm_conv_forward.1} parent=1 // pred_check_branch
      %722 = sbr.rel (0) target = $region33
    $region32: #{spectral_norm_conv_forward.1} parent=1 // pred_region
      _
    $region33: #{spectral_norm_conv_forward.1} parent=1 // pred_fallthru
      _
    // Predicated region
    $region34: #{spectral_norm_conv_forward.1} parent=1 // pred_check
      _
    $region35: #{spectral_norm_conv_forward.1} parent=1 // pred_check_branch
      %724 = sbr.rel (0) target = $region37
    $region36: #{spectral_norm_conv_forward.1} parent=1 // pred_region
      %s726 = ssub.s32 16, 16
      %727 = vsyncadd [#allocation4], %s726
      %s729 = sshll.u32 [#allocation3], 4
      %s730 = int_to_ptr.vmem [resolvable:$true] %s729
      %732 = dma.vmem_to_hbm [thread:$0]  %s730, 16, %s8, [#allocation4]
    $region37: #{spectral_norm_conv_forward.1} parent=1 // pred_fallthru
      _
    // Predicated region
    $region38: #{spectral_norm_conv_forward.1} parent=1 // pred_check
      _
    $region39: #{spectral_norm_conv_forward.1} parent=1 // pred_check_branch
      %734 = sbr.rel (0) target = $region41
    $region40: #{spectral_norm_conv_forward.1} parent=1 // pred_region
      %s736 = ssub.s32 16, 16
      %737 = vsyncadd [#allocation6], %s736
      %s739 = sshll.u32 [#allocation5], 4
      %s740 = int_to_ptr.vmem [resolvable:$true] %s739
      %742 = dma.vmem_to_hbm [thread:$0]  %s740, 16, %s9, [#allocation6]
    $region41: #{spectral_norm_conv_forward.1} parent=1 // pred_fallthru
      _
    // Predicated region
    $region42: #{spectral_norm_conv_forward.1} parent=1 // pred_check
      _
    $region43: #{spectral_norm_conv_forward.1} parent=1 // pred_check_branch
      %744 = sbr.rel (0) target = $region45
    $region44: #{spectral_norm_conv_forward.1} parent=1 // pred_region
      _
    $region45: #{spectral_norm_conv_forward.1} parent=1 // pred_fallthru
      _
    // Predicated region
    $region46: #{spectral_norm_conv_forward.1} parent=1 // pred_check
      _
    $region47: #{spectral_norm_conv_forward.1} parent=1 // pred_check_branch
      %746 = sbr.rel (0) target = $region49
    $region48: #{spectral_norm_conv_forward.1} parent=1 // pred_region
      _
    $region49: #{spectral_norm_conv_forward.1} parent=1 // pred_fallthru
      _
    // Predicated region
    $region50: #{spectral_norm_conv_forward.1} parent=1 // pred_check
      _
    $region51: #{spectral_norm_conv_forward.1} parent=1 // pred_check_branch
      %748 = sbr.rel (0) target = $region53
    $region52: #{spectral_norm_conv_forward.1} parent=1 // pred_region
      %749 = dma.done [#allocation4], 16
    $region53: #{spectral_norm_conv_forward.1} parent=1 // pred_fallthru
      _
    // Predicated region
    $region54: #{spectral_norm_conv_forward.1} parent=1 // pred_check
      _
    $region55: #{spectral_norm_conv_forward.1} parent=1 // pred_check_branch
      %751 = sbr.rel (0) target = $region57
    $region56: #{spectral_norm_conv_forward.1} parent=1 // pred_region
      %752 = dma.done [#allocation6], 16
    $region57: #{spectral_norm_conv_forward.1} parent=1 // pred_fallthru
      _
    %753 = vsyncpa [#allocation4], 1
    %754 = vsyncpa [#allocation6], 1

</llo_original>
